<compile_context>
chip_gen: v7x
topology: tpu7x:2x2x1
jax: 0.10.0
libtpu: 0.0.40
codegen_flags: <defaults>
</compile_context>

<pallas_src>
import jax
import jax.numpy as jnp
from jax.experimental import pallas as pl
from jax.experimental.pallas import tpu as pltpu


# ----------------------------- kernels ------------------------------------


def _residual_channelmix_vpu_kernel(x_ref, w_ref, b_ref, o_ref):
    """Tiny-C path: unrolled VPU channel mix; w/b live in SMEM (scalar reads).

    x_ref/o_ref: (bb, C, tn) VMEM tile.  w_ref: (C, C) f32 SMEM.  b_ref: (C,) f32 SMEM.
    """
    x = x_ref[...].astype(jnp.float32)          # (bb, C, tn)
    _, C, _ = x_ref.shape
    outs = []
    for o in range(C):                          # static unroll: C is tiny (<=16)
        acc = x[:, o, :]                        # residual term for channel o
        for i in range(C):
            acc = acc + w_ref[o, i] * x[:, i, :]
        outs.append(acc + b_ref[o])
    o_ref[...] = jnp.stack(outs, axis=1).astype(o_ref.dtype)


def _residual_conv1x1_mxu_kernel(x_ref, w_ref, b_ref, o_ref):
    """General path: 1x1 conv on the MXU, f32 accumulation, fused residual add.

    x_ref/o_ref: (bb, C, tn) VMEM tile.  w_ref: (C, C) VMEM.  b_ref: (C, 1) VMEM.
    """
    bb = x_ref.shape[0]
    w = w_ref[...]
    bias = b_ref[...].astype(jnp.float32)       # (C, 1), broadcasts over lanes
    for bi in range(bb):                        # bb is small & static
        x = x_ref[bi]                           # (C, tn)
        y = jnp.dot(w, x, preferred_element_type=jnp.float32)
        o_ref[bi] = (y + bias + x.astype(jnp.float32)).astype(o_ref.dtype)


# ----------------------------- wrapper -------------------------------------


def _device_kind():
    try:
        return jax.devices()[0].device_kind.lower()
    except Exception:
        return ""


def _is_v7x():
    kind = _device_kind()
    return ("v7" in kind) or ("7x" in kind)


def _pick_tn(N, C, itemsize, target_bytes):
    """Lane-dense spatial tile, sized by bytes.  Multiple of 128 or full N."""
    per_lane = C * itemsize
    want = max(1, target_bytes // per_lane)
    want = ((want + 127) // 128) * 128          # round up to 128 lanes
    if want >= N or N <= 128:
        return N                                # full extent (allowed even unaligned)
    return max(128, min(want, (N // 128) * 128))


def _pick_bb(B, C, tn, itemsize, min_bytes):
    """Block enough batch elements per step to keep DMAs >= ~min_bytes."""
    per_img = C * tn * itemsize
    if per_img >= min_bytes:
        return 1
    return int(min(B, max(1, -(-min_bytes // per_img))))


def residual_conv1x1(x_nchw, w, b, *, target_tile_bytes=1 << 20):
    """out = conv1x1(x) + x, NCHW in / NCHW out.  w: (C_out, C_in), b: (C,)."""
    B, C, H, W = x_nchw.shape
    N = H * W
    itemsize = jnp.dtype(x_nchw.dtype).itemsize

    # NCHW-native: (B, C, H, W) -> (B, C, N).  Pure reshape, no transpose.
    x3 = x_nchw.reshape(B, C, N)

    # ---- tiling, sized by bytes ----
    tn = _pick_tn(N, C, itemsize, target_tile_bytes)
    bb = _pick_bb(B, C, tn, itemsize, min_bytes=target_tile_bytes // 2)
    grid = (pl.cdiv(B, bb), pl.cdiv(N, tn))     # ragged tails -> masked writes

    # ---- path selection: tiny C -> VPU channel mix, else MXU matmul ----
    use_vpu = (C <= 8) or (itemsize < 4 and C <= 16)

    x_spec = pl.BlockSpec((bb, C, tn), lambda bi, j: (bi, 0, j))
    o_spec = pl.BlockSpec((bb, C, tn), lambda bi, j: (bi, 0, j))

    if use_vpu:
        kernel = _residual_channelmix_vpu_kernel
        # Tiny weight/bias as f32 scalars in SMEM (cheap scalar reads).
        w_arg = w.astype(jnp.float32)
        b_arg = b.astype(jnp.float32)
        w_spec = pl.BlockSpec(memory_space=pltpu.MemorySpace.SMEM)
        b_spec = pl.BlockSpec(memory_space=pltpu.MemorySpace.SMEM)
        resident_vmem = 0
    else:
        kernel = _residual_conv1x1_mxu_kernel
        w_arg = w
        b_arg = b.reshape(C, 1)
        const_map = lambda bi, j: (0, 0)        # resident: DMA'd once
        if C >= 256:
            # Never changes -> single buffer to reclaim C^2*itemsize of VMEM.
            w_spec = pl.BlockSpec((C, C), const_map, pipeline_mode=pl.Buffered(1))
            b_spec = pl.BlockSpec((C, 1), const_map, pipeline_mode=pl.Buffered(1))
            resident_vmem = C * C * jnp.dtype(w.dtype).itemsize + C * 4
        else:
            w_spec = pl.BlockSpec((C, C), const_map)
            b_spec = pl.BlockSpec((C, 1), const_map)
            resident_vmem = 2 * (C * C * jnp.dtype(w.dtype).itemsize + C * 4)

    # ---- generation-aware compiler params ----
    tile_bytes = bb * C * tn * itemsize
    vmem_need = 2 * (2 * tile_bytes) + resident_vmem + (2 << 20)  # dbl-buf in+out
    vmem_cap = (48 << 20) if _is_v7x() else (96 << 20)
    vmem_limit = int(min(max(vmem_need, 4 << 20), vmem_cap))

    if _is_v7x() and grid[0] >= 2:
        dim_sem = (pltpu.CORE_PARALLEL,) + (pltpu.PARALLEL,) * (len(grid) - 1)
    else:
        dim_sem = (pltpu.PARALLEL,) * len(grid)

    out3 = pl.pallas_call(
        kernel,
        out_shape=jax.ShapeDtypeStruct((B, C, N), x_nchw.dtype),
        grid_spec=pltpu.PrefetchScalarGridSpec(
            num_scalar_prefetch=0,
            grid=grid,
            in_specs=[x_spec, w_spec, b_spec],
            out_specs=o_spec,
        ),
        compiler_params=pltpu.CompilerParams(
            dimension_semantics=dim_sem,
            vmem_limit_bytes=vmem_limit,
        ),
    )(x3, w_arg, b_arg)

    return out3.reshape(B, C, H, W)


# ----------------------------- test ----------------------------------------


if __name__ == "__main__":
    # Deterministic inputs / parameters, small shapes.
    B, C, H, W = 2, 4, 16, 16
    key = jax.random.PRNGKey(0)
    kx, kw, kb = jax.random.split(key, 3)

    x = jax.random.normal(kx, (B, C, H, W), dtype=jnp.float32)
    # fn = 1x1 conv: weight (C_out, C_in), deterministic kaiming-ish init.
    w = jax.random.normal(kw, (C, C), dtype=jnp.float32) * (1.0 / C ** 0.5)
    b = jax.random.normal(kb, (C,), dtype=jnp.float32) * 0.01

    out = jax.block_until_ready(residual_conv1x1(x, w, b))

    # Pure-JAX reference of Residual(Conv1x1)(x).
    x3 = x.reshape(B, C, H * W)
    ref3 = jnp.einsum("oi,bin->bon", w, x3) + b[None, :, None] + x3
    ref = ref3.reshape(B, C, H, W)
    assert jnp.allclose(out, ref, atol=1e-5, rtol=1e-5), "mismatch vs reference"

    print("KERNEL_OK")
</pallas_src>

<mosaic_0001>
module attributes {stable_mosaic.version = 11 : i64} {
  func.func @_residual_channelmix_vpu_kernel(%arg0: i32, %arg1: i32, %arg2: memref<2x4x256xf32, #tpu.memory_space<vmem>>, %arg3: memref<4x4xf32, #tpu.memory_space<smem>>, %arg4: memref<4xf32, #tpu.memory_space<smem>>, %arg5: memref<2x4x256xf32, #tpu.memory_space<vmem>>) attributes {dimension_semantics = [#tpu.dimension_semantics<parallel>, #tpu.dimension_semantics<parallel>], iteration_bounds = array<i64: 1, 1>, scalar_prefetch = 0 : i64, scratch_operands = 0 : i64, tpu.core_type = #tpu.core_type<tc>, window_params = [{transform_indices = @transform_0, window_bounds = array<i64: 2, 4, 256>}, {transform_indices = @transform_1, window_bounds = array<i64: 4, 4>}, {transform_indices = @transform_2, window_bounds = array<i64: 4>}, {transform_indices = @transform_3, window_bounds = array<i64: 2, 4, 256>}]} {
    %c0 = arith.constant 0 : index
    %c0_0 = arith.constant 0 : index
    %c0_1 = arith.constant 0 : index
    %0 = vector.load %arg2[%c0, %c0_0, %c0_1] : memref<2x4x256xf32, #tpu.memory_space<vmem>>, vector<2x4x256xf32>
    %1 = vector.extract_strided_slice %0 {offsets = [0, 0, 0], sizes = [2, 1, 256], strides = [1, 1, 1]} : vector<2x4x256xf32> to vector<2x1x256xf32>
    %2 = vector.shape_cast %1 : vector<2x1x256xf32> to vector<2x256xf32>
    %c0_2 = arith.constant 0 : index
    %c0_3 = arith.constant 0 : index
    %3 = memref.load %arg3[%c0_2, %c0_3] : memref<4x4xf32, #tpu.memory_space<smem>>
    %4 = vector.extract_strided_slice %0 {offsets = [0, 0, 0], sizes = [2, 1, 256], strides = [1, 1, 1]} : vector<2x4x256xf32> to vector<2x1x256xf32>
    %5 = vector.shape_cast %4 : vector<2x1x256xf32> to vector<2x256xf32>
    %6 = vector.broadcast %3 : f32 to vector<2x256xf32>
    %7 = arith.mulf %6, %5 : vector<2x256xf32>
    %8 = arith.addf %2, %7 : vector<2x256xf32>
    %c0_4 = arith.constant 0 : index
    %c1 = arith.constant 1 : index
    %9 = memref.load %arg3[%c0_4, %c1] : memref<4x4xf32, #tpu.memory_space<smem>>
    %10 = vector.extract_strided_slice %0 {offsets = [0, 1, 0], sizes = [2, 1, 256], strides = [1, 1, 1]} : vector<2x4x256xf32> to vector<2x1x256xf32>
    %11 = vector.shape_cast %10 : vector<2x1x256xf32> to vector<2x256xf32>
    %12 = vector.broadcast %9 : f32 to vector<2x256xf32>
    %13 = arith.mulf %12, %11 : vector<2x256xf32>
    %14 = arith.addf %8, %13 : vector<2x256xf32>
    %c0_5 = arith.constant 0 : index
    %c2 = arith.constant 2 : index
    %15 = memref.load %arg3[%c0_5, %c2] : memref<4x4xf32, #tpu.memory_space<smem>>
    %16 = vector.extract_strided_slice %0 {offsets = [0, 2, 0], sizes = [2, 1, 256], strides = [1, 1, 1]} : vector<2x4x256xf32> to vector<2x1x256xf32>
    %17 = vector.shape_cast %16 : vector<2x1x256xf32> to vector<2x256xf32>
    %18 = vector.broadcast %15 : f32 to vector<2x256xf32>
    %19 = arith.mulf %18, %17 : vector<2x256xf32>
    %20 = arith.addf %14, %19 : vector<2x256xf32>
    %c0_6 = arith.constant 0 : index
    %c3 = arith.constant 3 : index
    %21 = memref.load %arg3[%c0_6, %c3] : memref<4x4xf32, #tpu.memory_space<smem>>
    %22 = vector.extract_strided_slice %0 {offsets = [0, 3, 0], sizes = [2, 1, 256], strides = [1, 1, 1]} : vector<2x4x256xf32> to vector<2x1x256xf32>
    %23 = vector.shape_cast %22 : vector<2x1x256xf32> to vector<2x256xf32>
    %24 = vector.broadcast %21 : f32 to vector<2x256xf32>
    %25 = arith.mulf %24, %23 : vector<2x256xf32>
    %26 = arith.addf %20, %25 : vector<2x256xf32>
    %c0_7 = arith.constant 0 : index
    %27 = memref.load %arg4[%c0_7] : memref<4xf32, #tpu.memory_space<smem>>
    %28 = vector.broadcast %27 : f32 to vector<2x256xf32>
    %29 = arith.addf %26, %28 : vector<2x256xf32>
    %30 = vector.extract_strided_slice %0 {offsets = [0, 1, 0], sizes = [2, 1, 256], strides = [1, 1, 1]} : vector<2x4x256xf32> to vector<2x1x256xf32>
    %31 = vector.shape_cast %30 : vector<2x1x256xf32> to vector<2x256xf32>
    %c1_8 = arith.constant 1 : index
    %c0_9 = arith.constant 0 : index
    %32 = memref.load %arg3[%c1_8, %c0_9] : memref<4x4xf32, #tpu.memory_space<smem>>
    %33 = vector.extract_strided_slice %0 {offsets = [0, 0, 0], sizes = [2, 1, 256], strides = [1, 1, 1]} : vector<2x4x256xf32> to vector<2x1x256xf32>
    %34 = vector.shape_cast %33 : vector<2x1x256xf32> to vector<2x256xf32>
    %35 = vector.broadcast %32 : f32 to vector<2x256xf32>
    %36 = arith.mulf %35, %34 : vector<2x256xf32>
    %37 = arith.addf %31, %36 : vector<2x256xf32>
    %c1_10 = arith.constant 1 : index
    %c1_11 = arith.constant 1 : index
    %38 = memref.load %arg3[%c1_10, %c1_11] : memref<4x4xf32, #tpu.memory_space<smem>>
    %39 = vector.extract_strided_slice %0 {offsets = [0, 1, 0], sizes = [2, 1, 256], strides = [1, 1, 1]} : vector<2x4x256xf32> to vector<2x1x256xf32>
    %40 = vector.shape_cast %39 : vector<2x1x256xf32> to vector<2x256xf32>
    %41 = vector.broadcast %38 : f32 to vector<2x256xf32>
    %42 = arith.mulf %41, %40 : vector<2x256xf32>
    %43 = arith.addf %37, %42 : vector<2x256xf32>
    %c1_12 = arith.constant 1 : index
    %c2_13 = arith.constant 2 : index
    %44 = memref.load %arg3[%c1_12, %c2_13] : memref<4x4xf32, #tpu.memory_space<smem>>
    %45 = vector.extract_strided_slice %0 {offsets = [0, 2, 0], sizes = [2, 1, 256], strides = [1, 1, 1]} : vector<2x4x256xf32> to vector<2x1x256xf32>
    %46 = vector.shape_cast %45 : vector<2x1x256xf32> to vector<2x256xf32>
    %47 = vector.broadcast %44 : f32 to vector<2x256xf32>
    %48 = arith.mulf %47, %46 : vector<2x256xf32>
    %49 = arith.addf %43, %48 : vector<2x256xf32>
    %c1_14 = arith.constant 1 : index
    %c3_15 = arith.constant 3 : index
    %50 = memref.load %arg3[%c1_14, %c3_15] : memref<4x4xf32, #tpu.memory_space<smem>>
    %51 = vector.extract_strided_slice %0 {offsets = [0, 3, 0], sizes = [2, 1, 256], strides = [1, 1, 1]} : vector<2x4x256xf32> to vector<2x1x256xf32>
    %52 = vector.shape_cast %51 : vector<2x1x256xf32> to vector<2x256xf32>
    %53 = vector.broadcast %50 : f32 to vector<2x256xf32>
    %54 = arith.mulf %53, %52 : vector<2x256xf32>
    %55 = arith.addf %49, %54 : vector<2x256xf32>
    %c1_16 = arith.constant 1 : index
    %56 = memref.load %arg4[%c1_16] : memref<4xf32, #tpu.memory_space<smem>>
    %57 = vector.broadcast %56 : f32 to vector<2x256xf32>
    %58 = arith.addf %55, %57 : vector<2x256xf32>
    %59 = vector.extract_strided_slice %0 {offsets = [0, 2, 0], sizes = [2, 1, 256], strides = [1, 1, 1]} : vector<2x4x256xf32> to vector<2x1x256xf32>
    %60 = vector.shape_cast %59 : vector<2x1x256xf32> to vector<2x256xf32>
    %c2_17 = arith.constant 2 : index
    %c0_18 = arith.constant 0 : index
    %61 = memref.load %arg3[%c2_17, %c0_18] : memref<4x4xf32, #tpu.memory_space<smem>>
    %62 = vector.extract_strided_slice %0 {offsets = [0, 0, 0], sizes = [2, 1, 256], strides = [1, 1, 1]} : vector<2x4x256xf32> to vector<2x1x256xf32>
    %63 = vector.shape_cast %62 : vector<2x1x256xf32> to vector<2x256xf32>
    %64 = vector.broadcast %61 : f32 to vector<2x256xf32>
    %65 = arith.mulf %64, %63 : vector<2x256xf32>
    %66 = arith.addf %60, %65 : vector<2x256xf32>
    %c2_19 = arith.constant 2 : index
    %c1_20 = arith.constant 1 : index
    %67 = memref.load %arg3[%c2_19, %c1_20] : memref<4x4xf32, #tpu.memory_space<smem>>
    %68 = vector.extract_strided_slice %0 {offsets = [0, 1, 0], sizes = [2, 1, 256], strides = [1, 1, 1]} : vector<2x4x256xf32> to vector<2x1x256xf32>
    %69 = vector.shape_cast %68 : vector<2x1x256xf32> to vector<2x256xf32>
    %70 = vector.broadcast %67 : f32 to vector<2x256xf32>
    %71 = arith.mulf %70, %69 : vector<2x256xf32>
    %72 = arith.addf %66, %71 : vector<2x256xf32>
    %c2_21 = arith.constant 2 : index
    %c2_22 = arith.constant 2 : index
    %73 = memref.load %arg3[%c2_21, %c2_22] : memref<4x4xf32, #tpu.memory_space<smem>>
    %74 = vector.extract_strided_slice %0 {offsets = [0, 2, 0], sizes = [2, 1, 256], strides = [1, 1, 1]} : vector<2x4x256xf32> to vector<2x1x256xf32>
    %75 = vector.shape_cast %74 : vector<2x1x256xf32> to vector<2x256xf32>
    %76 = vector.broadcast %73 : f32 to vector<2x256xf32>
    %77 = arith.mulf %76, %75 : vector<2x256xf32>
    %78 = arith.addf %72, %77 : vector<2x256xf32>
    %c2_23 = arith.constant 2 : index
    %c3_24 = arith.constant 3 : index
    %79 = memref.load %arg3[%c2_23, %c3_24] : memref<4x4xf32, #tpu.memory_space<smem>>
    %80 = vector.extract_strided_slice %0 {offsets = [0, 3, 0], sizes = [2, 1, 256], strides = [1, 1, 1]} : vector<2x4x256xf32> to vector<2x1x256xf32>
    %81 = vector.shape_cast %80 : vector<2x1x256xf32> to vector<2x256xf32>
    %82 = vector.broadcast %79 : f32 to vector<2x256xf32>
    %83 = arith.mulf %82, %81 : vector<2x256xf32>
    %84 = arith.addf %78, %83 : vector<2x256xf32>
    %c2_25 = arith.constant 2 : index
    %85 = memref.load %arg4[%c2_25] : memref<4xf32, #tpu.memory_space<smem>>
    %86 = vector.broadcast %85 : f32 to vector<2x256xf32>
    %87 = arith.addf %84, %86 : vector<2x256xf32>
    %88 = vector.extract_strided_slice %0 {offsets = [0, 3, 0], sizes = [2, 1, 256], strides = [1, 1, 1]} : vector<2x4x256xf32> to vector<2x1x256xf32>
    %89 = vector.shape_cast %88 : vector<2x1x256xf32> to vector<2x256xf32>
    %c3_26 = arith.constant 3 : index
    %c0_27 = arith.constant 0 : index
    %90 = memref.load %arg3[%c3_26, %c0_27] : memref<4x4xf32, #tpu.memory_space<smem>>
    %91 = vector.extract_strided_slice %0 {offsets = [0, 0, 0], sizes = [2, 1, 256], strides = [1, 1, 1]} : vector<2x4x256xf32> to vector<2x1x256xf32>
    %92 = vector.shape_cast %91 : vector<2x1x256xf32> to vector<2x256xf32>
    %93 = vector.broadcast %90 : f32 to vector<2x256xf32>
    %94 = arith.mulf %93, %92 : vector<2x256xf32>
    %95 = arith.addf %89, %94 : vector<2x256xf32>
    %c3_28 = arith.constant 3 : index
    %c1_29 = arith.constant 1 : index
    %96 = memref.load %arg3[%c3_28, %c1_29] : memref<4x4xf32, #tpu.memory_space<smem>>
    %97 = vector.extract_strided_slice %0 {offsets = [0, 1, 0], sizes = [2, 1, 256], strides = [1, 1, 1]} : vector<2x4x256xf32> to vector<2x1x256xf32>
    %98 = vector.shape_cast %97 : vector<2x1x256xf32> to vector<2x256xf32>
    %99 = vector.broadcast %96 : f32 to vector<2x256xf32>
    %100 = arith.mulf %99, %98 : vector<2x256xf32>
    %101 = arith.addf %95, %100 : vector<2x256xf32>
    %c3_30 = arith.constant 3 : index
    %c2_31 = arith.constant 2 : index
    %102 = memref.load %arg3[%c3_30, %c2_31] : memref<4x4xf32, #tpu.memory_space<smem>>
    %103 = vector.extract_strided_slice %0 {offsets = [0, 2, 0], sizes = [2, 1, 256], strides = [1, 1, 1]} : vector<2x4x256xf32> to vector<2x1x256xf32>
    %104 = vector.shape_cast %103 : vector<2x1x256xf32> to vector<2x256xf32>
    %105 = vector.broadcast %102 : f32 to vector<2x256xf32>
    %106 = arith.mulf %105, %104 : vector<2x256xf32>
    %107 = arith.addf %101, %106 : vector<2x256xf32>
    %c3_32 = arith.constant 3 : index
    %c3_33 = arith.constant 3 : index
    %108 = memref.load %arg3[%c3_32, %c3_33] : memref<4x4xf32, #tpu.memory_space<smem>>
    %109 = vector.extract_strided_slice %0 {offsets = [0, 3, 0], sizes = [2, 1, 256], strides = [1, 1, 1]} : vector<2x4x256xf32> to vector<2x1x256xf32>
    %110 = vector.shape_cast %109 : vector<2x1x256xf32> to vector<2x256xf32>
    %111 = vector.broadcast %108 : f32 to vector<2x256xf32>
    %112 = arith.mulf %111, %110 : vector<2x256xf32>
    %113 = arith.addf %107, %112 : vector<2x256xf32>
    %c3_34 = arith.constant 3 : index
    %114 = memref.load %arg4[%c3_34] : memref<4xf32, #tpu.memory_space<smem>>
    %115 = vector.broadcast %114 : f32 to vector<2x256xf32>
    %116 = arith.addf %113, %115 : vector<2x256xf32>
    %117 = vector.shape_cast %29 : vector<2x256xf32> to vector<2x1x256xf32>
    %118 = vector.shape_cast %58 : vector<2x256xf32> to vector<2x1x256xf32>
    %119 = vector.shape_cast %87 : vector<2x256xf32> to vector<2x1x256xf32>
    %120 = vector.shape_cast %116 : vector<2x256xf32> to vector<2x1x256xf32>
    %121 = tpu.concatenate %117, %118, %119, %120 in 1 : vector<2x1x256xf32>, vector<2x1x256xf32>, vector<2x1x256xf32>, vector<2x1x256xf32> -> vector<2x4x256xf32>
    %c0_35 = arith.constant 0 : index
    %c0_36 = arith.constant 0 : index
    %c0_37 = arith.constant 0 : index
    %122 = vector.load %arg5[%c0_35, %c0_36, %c0_37] : memref<2x4x256xf32, #tpu.memory_space<vmem>>, vector<2x4x256xf32>
    tpu.vector_store %arg5[%c0_35, %c0_36, %c0_37], %121 {strides = array<i32>} : memref<2x4x256xf32, #tpu.memory_space<vmem>>, vector<2x4x256xf32>,
    return
  }
  func.func @transform_0(%arg0: i32, %arg1: i32) -> (i32, i32, i32) {
    %c0_i32 = arith.constant 0 : i32
    %c0_i32_0 = arith.constant 0 : i32
    return %arg0, %c0_i32, %arg1 : i32, i32, i32
  }
  func.func @transform_1(%arg0: i32, %arg1: i32) -> (i32, i32) {
    %c0_i32 = arith.constant 0 : i32
    %c0_i32_0 = arith.constant 0 : i32
    %c0_i32_1 = arith.constant 0 : i32
    return %c0_i32, %c0_i32_0 : i32, i32
  }
  func.func @transform_2(%arg0: i32, %arg1: i32) -> i32 {
    %c0_i32 = arith.constant 0 : i32
    %c0_i32_0 = arith.constant 0 : i32
    return %c0_i32 : i32
  }
  func.func @transform_3(%arg0: i32, %arg1: i32) -> (i32, i32, i32) {
    %c0_i32 = arith.constant 0 : i32
    %c0_i32_0 = arith.constant 0 : i32
    return %arg0, %c0_i32, %arg1 : i32, i32, i32
  }
}

</mosaic_0001>

<llo_original>
// kernel: tpu_custom_call.1
$region0: #{tpu_custom_call.1}
  #allocation0 [shape = 'u32[]', space=smem, size = 0x4, offset = 0x4, fixed_abs, tag = 'smem constant byte address 0x4 - core index']
  #allocation1 [shape = 'u32[144,128]{1,0:T(1,128)}', space=vmem, size = 0x12000, scoped, tag = 'internal scratch']
  %s0 = inlined_call_operand.hbm [shape: f32[2,4,256], index: 0, kind: input, shape index: {}]
  %s1 = inlined_call_operand.hbm [shape: f32[4,4], index: 1, kind: input, shape index: {}]
  %s2 = inlined_call_operand.vmem [shape: f32[4], index: 2, kind: input, shape index: {}]
  %s3 = inlined_call_operand.hbm [shape: f32[2,4,256], index: 3, kind: output, shape index: {}]
  %s4 = sld [smem:[#allocation0]]
  $region34: #{tpu_custom_call.1} parent=0
    _
  %s6 = ssub.s32 1, %s4
  %s7 = scalar_select 0, %s6, %s4
  $region1: #{tpu_custom_call.1} parent=0
    #allocation2 [shape = 'u8[8192]{0}', space=vmem, size = 0x2000, scoped, tag = 'input window, operand 0, single buffered']
    #allocation3 [shape = 's32[1]{0}', space=sflag, size = 0x4, scoped, tag = 'scoped memory for tpu_custom_call.1']
    #allocation4 [shape = 's32[1]{0}', space=sflag, size = 0x4, scoped, tag = 'scoped memory for tpu_custom_call.1']
    #allocation5 [shape = 's32[1]{0}', space=sflag, size = 0x4, scoped, tag = 'scoped memory for tpu_custom_call.1']
    #allocation6 [shape = 's32[1]{0}', space=sflag, size = 0x4, scoped, tag = 'scoped memory for tpu_custom_call.1']
    #allocation7 [shape = 'u8[2048]{0}', space=smem, size = 0x800, scoped, tag = 'input window, operand 1, single buffered']
    #allocation8 [shape = 'u8[512]{0}', space=smem, size = 0x200, scoped, tag = 'input window, operand 2, single buffered']
    #allocation9 [shape = 'u8[8192]{0}', space=vmem, size = 0x2000, scoped, tag = 'output window, operand 0, single buffered']
    %8 = vsyncpa [#allocation3], 0
    %9 = vsyncpa [#allocation5], 0
    %10 = vsyncpa [#allocation6], 0
    %11 = vsyncpa [#allocation4], 0
    // Predicated region
    $region2: #{tpu_custom_call.1} parent=1 // pred_check
      _
    $region3: #{tpu_custom_call.1} parent=1 // pred_check_branch
      %13 = sbr.rel (0) target = $region5
    $region4: #{tpu_custom_call.1} parent=1 // pred_region
      %s15 = ssub.s32 256, 256
      %16 = vsyncadd [#allocation3], %s15
      %s17 = sshll.u32 [#allocation2], 4
      %s18 = int_to_ptr.vmem [resolvable:$true] %s17
      %23 = dma.hbm_to_vmem [thread:$0]  %s0, 256, %s18, [#allocation3], 128, 128, 8
    $region5: #{tpu_custom_call.1} parent=1 // pred_fallthru
      _
    // Predicated region
    $region6: #{tpu_custom_call.1} parent=1 // pred_check
      _
    $region7: #{tpu_custom_call.1} parent=1 // pred_check_branch
      %25 = sbr.rel (0) target = $region9
    $region8: #{tpu_custom_call.1} parent=1 // pred_region
      %s27 = ssub.s32 64, 64
      %28 = vsyncadd [#allocation5], %s27
      %31 = dma.hbm_to_smem %s1, 64, [#allocation7], [#allocation5]
    $region9: #{tpu_custom_call.1} parent=1 // pred_fallthru
      _
    // Predicated region
    $region10: #{tpu_custom_call.1} parent=1 // pred_check
      _
    $region11: #{tpu_custom_call.1} parent=1 // pred_check_branch
      %33 = sbr.rel (0) target = $region13
    $region12: #{tpu_custom_call.1} parent=1 // pred_region
      %s35 = ssub.s32 16, 16
      %36 = vsyncadd [#allocation6], %s35
      %s38 = sshll.u32 %s2, 4
      %s39 = int_to_ptr.vmem [resolvable:$true] %s38
      %41 = dma.vmem_to_smem %s39, 16, [#allocation8], [#allocation6]
    $region13: #{tpu_custom_call.1} parent=1 // pred_fallthru
      _
    // Predicated region
    $region14: #{tpu_custom_call.1} parent=1 // pred_check
      _
    $region15: #{tpu_custom_call.1} parent=1 // pred_check_branch
      %43 = sbr.rel (0) target = $region17
    $region16: #{tpu_custom_call.1} parent=1 // pred_region
      %44 = dma.done [#allocation3], 256
    $region17: #{tpu_custom_call.1} parent=1 // pred_fallthru
      _
    // Predicated region
    $region18: #{tpu_custom_call.1} parent=1 // pred_check
      _
    $region19: #{tpu_custom_call.1} parent=1 // pred_check_branch
      %46 = sbr.rel (0) target = $region21
    $region20: #{tpu_custom_call.1} parent=1 // pred_region
      %47 = dma.done [#allocation5], 64
    $region21: #{tpu_custom_call.1} parent=1 // pred_fallthru
      _
    // Predicated region
    $region22: #{tpu_custom_call.1} parent=1 // pred_check
      _
    $region23: #{tpu_custom_call.1} parent=1 // pred_check_branch
      %49 = sbr.rel (0) target = $region25
    $region24: #{tpu_custom_call.1} parent=1 // pred_region
      %50 = dma.done [#allocation6], 16
    $region25: #{tpu_custom_call.1} parent=1 // pred_fallthru
      _
    %51 = sfence
    %v52 = vld [vmem:[#allocation2] sm:$0xff]
    %v53 = vld [vmem:[#allocation2 + $0x8] sm:$0xff]
    %s54 = sld [smem:[#allocation7]]
    %v55 = vstv %s54
    %v56 = vmul.f32 %v55, %v52
    %v57 = vmul.f32 %v55, %v53
    %v58 = vadd.f32 %v52, %v56
    %v59 = vadd.f32 %v53, %v57
    %s60 = sld [smem:[#allocation7 + $0x1]]
    %v61 = vstv %s60
    %v62 = vmul.f32 %v61, %v52
    %v63 = vmul.f32 %v61, %v53
    %v66 = vrot.slane %v62, 5
    %v67 = vrot.slane %v66, 4
    %v68 = vrot.slane %v63, 5
    %v69 = vrot.slane %v68, 4
    %v72 = vadd.f32 %v58, %v67
    %v73 = vadd.f32 %v59, %v69
    %s74 = sld [smem:[#allocation7 + $0x2]]
    %v75 = vstv %s74
    %v76 = vmul.f32 %v75, %v52
    %v77 = vmul.f32 %v75, %v53
    %v80 = vrot.slane %v76, 6
    %v81 = vrot.slane %v80, 4
    %v82 = vrot.slane %v77, 6
    %v83 = vrot.slane %v82, 4
    %v86 = vadd.f32 %v72, %v81
    %v87 = vadd.f32 %v73, %v83
    %s88 = sld [smem:[#allocation7 + $0x3]]
    %v89 = vstv %s88
    %v90 = vmul.f32 %v89, %v52
    %v91 = vmul.f32 %v89, %v53
    %v94 = vrot.slane %v90, 7
    %v95 = vrot.slane %v94, 4
    %v96 = vrot.slane %v91, 7
    %v97 = vrot.slane %v96, 4
    %v100 = vadd.f32 %v86, %v95
    %v101 = vadd.f32 %v87, %v97
    %s102 = sld [smem:[#allocation8]]
    %v103 = vstv %s102
    %v104 = vadd.f32 %v100, %v103
    %v105 = vadd.f32 %v101, %v103
    %s106 = sld [smem:[#allocation7 + $0x80]]
    %v107 = vstv %s106
    %v108 = vmul.f32 %v107, %v52
    %v109 = vmul.f32 %v107, %v53
    %v112 = vrot.slane %v108, 7
    %v113 = vrot.slane %v109, 7
    %v116 = vadd.f32 %v52, %v112
    %v117 = vadd.f32 %v53, %v113
    %s118 = sld [smem:[#allocation7 + $0x81]]
    %v119 = vstv %s118
    %v120 = vmul.f32 %v119, %v52
    %v121 = vmul.f32 %v119, %v53
    %v122 = vadd.f32 %v116, %v120
    %v123 = vadd.f32 %v117, %v121
    %s124 = sld [smem:[#allocation7 + $0x82]]
    %v125 = vstv %s124
    %v126 = vmul.f32 %v125, %v52
    %v127 = vmul.f32 %v125, %v53
    %v130 = vrot.slane %v126, 5
    %v131 = vrot.slane %v130, 4
    %v132 = vrot.slane %v127, 5
    %v133 = vrot.slane %v132, 4
    %v136 = vadd.f32 %v122, %v131
    %v137 = vadd.f32 %v123, %v133
    %s138 = sld [smem:[#allocation7 + $0x83]]
    %v139 = vstv %s138
    %v140 = vmul.f32 %v139, %v52
    %v141 = vmul.f32 %v139, %v53
    %v144 = vrot.slane %v140, 6
    %v145 = vrot.slane %v144, 4
    %v146 = vrot.slane %v141, 6
    %v147 = vrot.slane %v146, 4
    %v150 = vadd.f32 %v136, %v145
    %v151 = vadd.f32 %v137, %v147
    %s152 = sld [smem:[#allocation8 + $0x1]]
    %v153 = vstv %s152
    %v154 = vadd.f32 %v150, %v153
    %v155 = vadd.f32 %v151, %v153
    %s156 = sld [smem:[#allocation7 + $0x100]]
    %v157 = vstv %s156
    %v158 = vmul.f32 %v157, %v52
    %v159 = vmul.f32 %v157, %v53
    %v162 = vrot.slane %v158, 6
    %v163 = vrot.slane %v159, 6
    %v166 = vadd.f32 %v52, %v162
    %v167 = vadd.f32 %v53, %v163
    %s168 = sld [smem:[#allocation7 + $0x101]]
    %v169 = vstv %s168
    %v170 = vmul.f32 %v169, %v52
    %v171 = vmul.f32 %v169, %v53
    %v174 = vrot.slane %v170, 7
    %v175 = vrot.slane %v171, 7
    %v178 = vadd.f32 %v166, %v174
    %v179 = vadd.f32 %v167, %v175
    %s180 = sld [smem:[#allocation7 + $0x102]]
    %v181 = vstv %s180
    %v182 = vmul.f32 %v181, %v52
    %v183 = vmul.f32 %v181, %v53
    %v184 = vadd.f32 %v178, %v182
    %v185 = vadd.f32 %v179, %v183
    %s186 = sld [smem:[#allocation7 + $0x103]]
    %v187 = vstv %s186
    %v188 = vmul.f32 %v187, %v52
    %v189 = vmul.f32 %v187, %v53
    %v192 = vrot.slane %v188, 5
    %v193 = vrot.slane %v192, 4
    %v194 = vrot.slane %v189, 5
    %v195 = vrot.slane %v194, 4
    %v198 = vadd.f32 %v184, %v193
    %v199 = vadd.f32 %v185, %v195
    %s200 = sld [smem:[#allocation8 + $0x2]]
    %v201 = vstv %s200
    %v202 = vadd.f32 %v198, %v201
    %v203 = vadd.f32 %v199, %v201
    %s204 = sld [smem:[#allocation7 + $0x180]]
    %v205 = vstv %s204
    %v206 = vmul.f32 %v205, %v52
    %v207 = vmul.f32 %v205, %v53
    %v210 = vrot.slane %v206, 5
    %v211 = vrot.slane %v207, 5
    %v214 = vadd.f32 %v52, %v210
    %v215 = vadd.f32 %v53, %v211
    %s216 = sld [smem:[#allocation7 + $0x181]]
    %v217 = vstv %s216
    %v218 = vmul.f32 %v217, %v52
    %v219 = vmul.f32 %v217, %v53
    %v222 = vrot.slane %v218, 6
    %v223 = vrot.slane %v219, 6
    %v226 = vadd.f32 %v214, %v222
    %v227 = vadd.f32 %v215, %v223
    %s228 = sld [smem:[#allocation7 + $0x182]]
    %v229 = vstv %s228
    %v230 = vmul.f32 %v229, %v52
    %v231 = vmul.f32 %v229, %v53
    %v234 = vrot.slane %v230, 7
    %v235 = vrot.slane %v231, 7
    %v238 = vadd.f32 %v226, %v234
    %v239 = vadd.f32 %v227, %v235
    %s240 = sld [smem:[#allocation7 + $0x183]]
    %v241 = vstv %s240
    %v242 = vmul.f32 %v241, %v52
    %v243 = vmul.f32 %v241, %v53
    %v244 = vadd.f32 %v238, %v242
    %v245 = vadd.f32 %v239, %v243
    %s246 = sld [smem:[#allocation8 + $0x3]]
    %v247 = vstv %s246
    %v248 = vadd.f32 %v244, %v247
    %v249 = vadd.f32 %v245, %v247
    %v252 = vlaneseq
    %v253 = vshrl.u32 %v252, 7
    %v254 = vsub.s32 0, %v253
    %v255 = vrot.slane %v104, %v254
    %v256 = vlaneseq
    %v257 = vshrl.u32 %v256, 7
    %v258 = vsub.s32 4, %v257
    %v259 = vrot.slane %v104, %v258
    %v260 = vlaneseq
    %v261 = vshrl.u32 %v260, 7
    %v262 = vsub.s32 0, %v261
    %v263 = vrot.slane %v105, %v262
    %v264 = vlaneseq
    %v265 = vshrl.u32 %v264, 7
    %v266 = vsub.s32 4, %v265
    %v267 = vrot.slane %v105, %v266
    %v274 = vlaneseq
    %v275 = vshrl.u32 %v274, 7
    %v276 = vsub.s32 1, %v275
    %v277 = vrot.slane %v154, %v276
    %v278 = vlaneseq
    %v279 = vshrl.u32 %v278, 7
    %v280 = vsub.s32 5, %v279
    %v281 = vrot.slane %v154, %v280
    %v282 = vlaneseq
    %v283 = vshrl.u32 %v282, 7
    %v284 = vsub.s32 1, %v283
    %v285 = vrot.slane %v155, %v284
    %v286 = vlaneseq
    %v287 = vshrl.u32 %v286, 7
    %v288 = vsub.s32 5, %v287
    %v289 = vrot.slane %v155, %v288
    %v296 = vlaneseq
    %v297 = vshrl.u32 %v296, 7
    %v298 = vsub.s32 2, %v297
    %v299 = vrot.slane %v202, %v298
    %v300 = vlaneseq
    %v301 = vshrl.u32 %v300, 7
    %v302 = vsub.s32 6, %v301
    %v303 = vrot.slane %v202, %v302
    %v304 = vlaneseq
    %v305 = vshrl.u32 %v304, 7
    %v306 = vsub.s32 2, %v305
    %v307 = vrot.slane %v203, %v306
    %v308 = vlaneseq
    %v309 = vshrl.u32 %v308, 7
    %v310 = vsub.s32 6, %v309
    %v311 = vrot.slane %v203, %v310
    %v318 = vlaneseq
    %v319 = vshrl.u32 %v318, 7
    %v320 = vsub.s32 3, %v319
    %v321 = vrot.slane %v248, %v320
    %v322 = vlaneseq
    %v323 = vshrl.u32 %v322, 7
    %v324 = vsub.s32 7, %v323
    %v325 = vrot.slane %v248, %v324
    %v326 = vlaneseq
    %v327 = vshrl.u32 %v326, 7
    %v328 = vsub.s32 3, %v327
    %v329 = vrot.slane %v249, %v328
    %v330 = vlaneseq
    %v331 = vshrl.u32 %v330, 7
    %v332 = vsub.s32 7, %v331
    %v333 = vrot.slane %v249, %v332
    %vm338 = vcmask 1040384
    %v339 = vsel %vm338, %v255, %v277
    %v340 = vsel %vm338, %v259, %v281
    %v341 = vsel %vm338, %v263, %v285
    %v342 = vsel %vm338, %v267, %v289
    %vm343 = vcmask 1041408
    %v344 = vsel %vm343, %v339, %v299
    %v345 = vsel %vm343, %v340, %v303
    %v346 = vsel %vm343, %v341, %v307
    %v347 = vsel %vm343, %v342, %v311
    %vm348 = vcmask 1042432
    %v349 = vsel %vm348, %v344, %v321
    %v350 = vsel %vm348, %v345, %v325
    %v351 = vsel %vm348, %v346, %v329
    %v352 = vsel %vm348, %v347, %v333
    %v357 = vcombine.low %v349, %v350
    %v358 = vcombine.low %v351, %v352
    %361 = vst [vmem:[#allocation9] sm:$0xff] %v357
    %362 = vst [vmem:[#allocation9 + $0x8] sm:$0xff] %v358
    // Predicated region
    $region26: #{tpu_custom_call.1} parent=1 // pred_check
      _
    $region27: #{tpu_custom_call.1} parent=1 // pred_check_branch
      %364 = sbr.rel (0) target = $region29
    $region28: #{tpu_custom_call.1} parent=1 // pred_region
      %s366 = ssub.s32 256, 256
      %367 = vsyncadd [#allocation4], %s366
      %s368 = sshll.u32 [#allocation9], 4
      %s369 = int_to_ptr.vmem [resolvable:$true] %s368
      %374 = dma.vmem_to_hbm [thread:$0]  %s369, 256, %s3, [#allocation4], 128, 128, 8
    $region29: #{tpu_custom_call.1} parent=1 // pred_fallthru
      _
    // Predicated region
    $region30: #{tpu_custom_call.1} parent=1 // pred_check
      _
    $region31: #{tpu_custom_call.1} parent=1 // pred_check_branch
      %376 = sbr.rel (0) target = $region33
    $region32: #{tpu_custom_call.1} parent=1 // pred_region
      %377 = dma.done [#allocation4], 256
    $region33: #{tpu_custom_call.1} parent=1 // pred_fallthru
      _
    %378 = vsyncpa [#allocation3], 1
    %379 = vsyncpa [#allocation4], 1
    %380 = vsyncpa [#allocation5], 1
    %381 = vsyncpa [#allocation6], 1

</llo_original>
